<compile_context>
chip_gen: v7x
topology: tpu7x:2x2x1
jax: 0.10.0
libtpu: 0.0.40
codegen_flags: <defaults>
</compile_context>

<pallas_src>
import functools

import jax
import jax.numpy as jnp
from jax.experimental import pallas as pl
from jax.experimental.pallas import tpu as pltpu


def _tfn_kernel(t_ref, va_ref, et_ref, bias_ref, o_ref, *, tp):
    # t_ref   : (TILE_N, T)      raw text rows (no ones column)
    # va_ref  : (TILE_N, VA)     precomputed (v_cat ⊗ a_cat) rows, VA = (V+1)*(A+1)
    # et_ref  : (T, FUSED)       0/1 selection matrix: Et[k, f] = (f // VA == k)
    # bias_ref: (1, FUSED)       ones-column contribution of text: (f // VA == T)
    # o_ref   : (TILE_N, FUSED)  FUSED = (T+1) * VA, row-major 'tva' order
    #
    # T expansion: one exact 0/1 selection matmul (f32 accumulate) + bias row.
    t_exp = jnp.dot(t_ref[...], et_ref[...],
                    preferred_element_type=jnp.float32) + bias_ref[...]
    # VA expansion: out lane f needs va[:, f % VA]; FUSED = (T+1)*VA, so this is
    # (T+1) back-to-back copies of the VA-wide block along the lane axis.
    # Pure lane concatenation: no MXU, no in-kernel reshape.
    va = va_ref[...].astype(jnp.float32)
    va_tiled = jnp.concatenate([va] * tp, axis=-1)
    o_ref[...] = (t_exp * va_tiled).astype(o_ref.dtype)


def tensor_fusion_network(text, visual, acoustic, *, tile_n=None):
    """Pallas implementation of TensorFusionNetwork.forward.

    text: (S, B, T), visual: (S, B, V), acoustic: (S, B, A)
    returns: (S, B, (T+1)*(V+1)*(A+1))
    """
    S, B, T = text.shape
    V = visual.shape[2]
    A = acoustic.shape[2]
    Tp, Vp, Ap = T + 1, V + 1, A + 1
    VA = Vp * Ap
    FUSED = Tp * VA
    N = S * B
    dtype = text.dtype
    itemsize = jnp.dtype(dtype).itemsize

    # ---------------- wrapper-side prep (cheap, small arrays) ----------------
    t_in = text.reshape(N, T)                              # metadata-only reshape
    ones = jnp.ones((S, B, 1), dtype)
    v_cat = jnp.concatenate([visual, ones], axis=2)        # (S, B, Vp)
    a_cat = jnp.concatenate([acoustic, ones], axis=2)      # (S, B, Ap)
    # va[n, v*Ap + a] = v_cat[n, v] * a_cat[n, a]
    va_in = jnp.einsum('sbv,sba->sbva', v_cat, a_cat).reshape(N, VA)

    # Selection matrix / bias reproducing the 'sbtva' flatten: f = t*VA + v*Ap + a.
    f = jnp.arange(FUSED)
    t_idx = f // VA
    et = (jnp.arange(T)[:, None] == t_idx[None, :]).astype(jnp.float32)   # (T, FUSED)
    bias = (t_idx == T).astype(jnp.float32)[None, :]                      # (1, FUSED)

    # ---------------- tile sizing ----------------
    sub = 8 if itemsize >= 4 else 16          # sublane multiple (16 for bf16)
    row_bytes = FUSED * itemsize

    def vmem_est(tn):
        out_blk = tn * FUSED * 4              # f32 intermediates are full width
        in_blk = tn * (T + VA) * itemsize
        consts = (T + 1) * FUSED * 4
        # 2x double-buffered output + ~3x full-width intermediates + 2x inputs.
        return 5 * out_blk + 2 * in_blk + consts

    if tile_n is None:
        tile_n = max(sub, (4 << 20) // row_bytes)   # ~4 MiB output block target
        if N >= 8 * sub:
            # Prefer >= 8 grid steps: v7x gets both TCs busy, pipeline has depth.
            tile_n = min(tile_n, pl.cdiv(N, 8))
    tile_n = min(tile_n, N)
    if N >= sub:
        tile_n = max(sub, (tile_n // sub) * sub)
    # Keep the live VMEM footprint (incl. intermediates) well under 24 MiB.
    while tile_n > sub and vmem_est(tile_n) > (24 << 20):
        tile_n = max(sub, ((tile_n // 2) // sub) * sub)
    grid_n = pl.cdiv(N, tile_n)

    vmem_limit = int(min(32 << 20, max(16 << 20, 2 * vmem_est(tile_n))))

    cost = pl.CostEstimate(
        flops=2 * N * FUSED * T + 2 * N * FUSED,
        transcendentals=0,
        bytes_accessed=itemsize * N * (T + VA + FUSED) + 4 * (T + 1) * FUSED,
    )

    out = pl.pallas_call(
        functools.partial(_tfn_kernel, tp=Tp),
        out_shape=jax.ShapeDtypeStruct((N, FUSED), dtype),
        grid=(grid_n,),
        in_specs=[
            pl.BlockSpec((tile_n, T), lambda i: (i, 0)),     # raw text rows
            pl.BlockSpec((tile_n, VA), lambda i: (i, 0)),    # precomputed v⊗a rows
            pl.BlockSpec((T, FUSED), lambda i: (0, 0)),      # constant Et
            pl.BlockSpec((1, FUSED), lambda i: (0, 0)),      # constant bias row
        ],
        out_specs=pl.BlockSpec((tile_n, FUSED), lambda i: (i, 0)),
        compiler_params=pltpu.CompilerParams(
            dimension_semantics=("parallel",),
            vmem_limit_bytes=vmem_limit),
        cost_estimate=cost,
    )(t_in, va_in, et, bias)

    # (N, FUSED) -> (S, B, FUSED): pure metadata reshape, no transpose.
    return out.reshape(S, B, FUSED)


def tensor_fusion_reference(text, visual, acoustic):
    S, B, _ = text.shape
    ones = jnp.ones((S, B, 1), text.dtype)
    t = jnp.concatenate([text, ones], axis=2)
    v = jnp.concatenate([visual, ones], axis=2)
    a = jnp.concatenate([acoustic, ones], axis=2)
    fusion = jnp.einsum('sbt,sbv,sba->sbtva', t, v, a)
    return fusion.reshape(S, B, -1)


if __name__ == "__main__":
    # Small, deterministic example shapes: seq=8, batch=2, dims (7, 3, 4).
    S, B = 8, 2
    text_dim, visual_dim, acoustic_dim = 7, 3, 4

    key = jax.random.PRNGKey(0)
    k1, k2, k3, k4, k5, k6 = jax.random.split(key, 6)
    text = jax.random.normal(k1, (S, B, text_dim), jnp.float32)
    visual = jax.random.normal(k2, (S, B, visual_dim), jnp.float32)
    acoustic = jax.random.normal(k3, (S, B, acoustic_dim), jnp.float32)

    ref = tensor_fusion_reference(text, visual, acoustic)
    expected_shape = (S, B, (text_dim + 1) * (visual_dim + 1) * (acoustic_dim + 1))

    # 1) Default tiling.
    out = jax.block_until_ready(tensor_fusion_network(text, visual, acoustic))
    assert out.shape == expected_shape
    assert jnp.allclose(out, ref, atol=1e-5, rtol=1e-5), "mismatch vs reference"

    # 2) Explicit multi-tile path (grid of 2 row tiles).
    out2 = jax.block_until_ready(
        tensor_fusion_network(text, visual, acoustic, tile_n=8))
    assert jnp.allclose(out2, ref, atol=1e-5, rtol=1e-5), "mismatch (tiled)"

    # 3) Non-divisible row count: N = 5*3 = 15 -> partial last row tile.
    S2, B2 = 5, 3
    text2 = jax.random.normal(k4, (S2, B2, text_dim), jnp.float32)
    visual2 = jax.random.normal(k5, (S2, B2, visual_dim), jnp.float32)
    acoustic2 = jax.random.normal(k6, (S2, B2, acoustic_dim), jnp.float32)
    ref3 = tensor_fusion_reference(text2, visual2, acoustic2)
    out3 = jax.block_until_ready(
        tensor_fusion_network(text2, visual2, acoustic2, tile_n=8))
    assert out3.shape == ref3.shape
    assert jnp.allclose(out3, ref3, atol=1e-5, rtol=1e-5), "mismatch (partial tile)"

    print("KERNEL_OK")
</pallas_src>

<mosaic_0001>
module attributes {stable_mosaic.version = 11 : i64} {
  func.func @_tfn_kernel(%arg0: i32, %arg1: memref<16x7xf32, #tpu.memory_space<vmem>>, %arg2: memref<16x20xf32, #tpu.memory_space<vmem>>, %arg3: memref<7x160xf32, #tpu.memory_space<vmem>>, %arg4: memref<1x160xf32, #tpu.memory_space<vmem>>, %arg5: memref<16x160xf32, #tpu.memory_space<vmem>>) attributes {dimension_semantics = [#tpu.dimension_semantics<parallel>], iteration_bounds = array<i64: 1>, scalar_prefetch = 0 : i64, scratch_operands = 0 : i64, tpu.core_type = #tpu.core_type<tc>, window_params = [{transform_indices = @transform_0, window_bounds = array<i64: 16, 7>}, {transform_indices = @transform_1, window_bounds = array<i64: 16, 20>}, {pipeline_mode = #tpu.pipeline_mode<synchronous>, transform_indices = @transform_2, window_bounds = array<i64: 7, 160>}, {pipeline_mode = #tpu.pipeline_mode<synchronous>, transform_indices = @transform_3, window_bounds = array<i64: 1, 160>}, {transform_indices = @transform_4, window_bounds = array<i64: 16, 160>}]} {
    %c0 = arith.constant 0 : index
    %c0_0 = arith.constant 0 : index
    %0 = vector.load %arg1[%c0, %c0_0] : memref<16x7xf32, #tpu.memory_space<vmem>>, vector<16x7xf32>
    %c0_1 = arith.constant 0 : index
    %c0_2 = arith.constant 0 : index
    %1 = vector.load %arg3[%c0_1, %c0_2] : memref<7x160xf32, #tpu.memory_space<vmem>>, vector<7x160xf32>
    %cst = arith.constant dense<0.000000e+00> : vector<16x160xf32>
    %2 = tpu.matmul %0, %1, %cst {dimension_numbers = #tpu.dot_dimension_numbers<[1], [0], [0], [1], [0, 0, 1, 1], [], []>} : vector<16x7xf32>, vector<7x160xf32>, vector<16x160xf32> -> vector<16x160xf32>
    %c0_3 = arith.constant 0 : index
    %c0_4 = arith.constant 0 : index
    %3 = vector.load %arg4[%c0_3, %c0_4] : memref<1x160xf32, #tpu.memory_space<vmem>>, vector<1x160xf32>
    %4 = vector.broadcast %3 : vector<1x160xf32> to vector<16x160xf32>
    %5 = arith.addf %2, %4 : vector<16x160xf32>
    %c0_5 = arith.constant 0 : index
    %c0_6 = arith.constant 0 : index
    %6 = vector.load %arg2[%c0_5, %c0_6] : memref<16x20xf32, #tpu.memory_space<vmem>>, vector<16x20xf32>
    %7 = tpu.concatenate %6, %6, %6, %6, %6, %6, %6, %6 in 1 : vector<16x20xf32>, vector<16x20xf32>, vector<16x20xf32>, vector<16x20xf32>, vector<16x20xf32>, vector<16x20xf32>, vector<16x20xf32>, vector<16x20xf32> -> vector<16x160xf32>
    %8 = arith.mulf %5, %7 : vector<16x160xf32>
    %c0_7 = arith.constant 0 : index
    %c0_8 = arith.constant 0 : index
    %9 = vector.load %arg5[%c0_7, %c0_8] : memref<16x160xf32, #tpu.memory_space<vmem>>, vector<16x160xf32>
    tpu.vector_store %arg5[%c0_7, %c0_8], %8 {strides = array<i32>} : memref<16x160xf32, #tpu.memory_space<vmem>>, vector<16x160xf32>,
    return
  }
  func.func @transform_0(%arg0: i32) -> (i32, i32) {
    %c0_i32 = arith.constant 0 : i32
    %c0_i32_0 = arith.constant 0 : i32
    return %arg0, %c0_i32 : i32, i32
  }
  func.func @transform_1(%arg0: i32) -> (i32, i32) {
    %c0_i32 = arith.constant 0 : i32
    %c0_i32_0 = arith.constant 0 : i32
    return %arg0, %c0_i32 : i32, i32
  }
  func.func @transform_2(%arg0: i32) -> (i32, i32) {
    %c0_i32 = arith.constant 0 : i32
    %c0_i32_0 = arith.constant 0 : i32
    %c0_i32_1 = arith.constant 0 : i32
    return %c0_i32, %c0_i32_0 : i32, i32
  }
  func.func @transform_3(%arg0: i32) -> (i32, i32) {
    %c0_i32 = arith.constant 0 : i32
    %c0_i32_0 = arith.constant 0 : i32
    %c0_i32_1 = arith.constant 0 : i32
    return %c0_i32, %c0_i32_0 : i32, i32
  }
  func.func @transform_4(%arg0: i32) -> (i32, i32) {
    %c0_i32 = arith.constant 0 : i32
    %c0_i32_0 = arith.constant 0 : i32
    return %arg0, %c0_i32 : i32, i32
  }
}

</mosaic_0001>

<llo_original>
// kernel: tpu_custom_call.1
$region0: #{tpu_custom_call.1}
  #allocation0 [shape = 'u32[]', space=smem, size = 0x4, offset = 0x4, fixed_abs, tag = 'smem constant byte address 0x4 - core index']
  #allocation1 [shape = 'u32[144,128]{1,0:T(1,128)}', space=vmem, size = 0x12000, scoped, tag = 'internal scratch']
  %s0 = inlined_call_operand.vmem [shape: f32[16,7], index: 0, kind: input, shape index: {}]
  %s1 = inlined_call_operand.vmem [shape: f32[16,20], index: 1, kind: input, shape index: {}]
  %s2 = inlined_call_operand.hbm [shape: f32[7,160], index: 2, kind: input, shape index: {}]
  %s3 = inlined_call_operand.vmem [shape: f32[1,160], index: 3, kind: input, shape index: {}]
  %s4 = inlined_call_operand.hbm [shape: f32[16,160], index: 4, kind: output, shape index: {}]
  %s5 = sld [smem:[#allocation0]]
  $region30: #{tpu_custom_call.1} parent=0
    _
  %s7 = ssub.s32 1, %s5
  %s8 = scalar_select 0, %s7, %s5
  $region1: #{tpu_custom_call.1} parent=0
    #allocation2 [shape = 'u8[8192]{0}', space=vmem, size = 0x2000, scoped, tag = 'input window, operand 2, single buffered']
    #allocation3 [shape = 's32[1]{0}', space=sflag, size = 0x4, scoped, tag = 'scoped memory for tpu_custom_call.1']
    #allocation4 [shape = 's32[1]{0}', space=sflag, size = 0x4, scoped, tag = 'scoped memory for tpu_custom_call.1']
    #allocation5 [shape = 'u8[16384]{0}', space=vmem, size = 0x4000, scoped, tag = 'output window, operand 0, single buffered']
    %9 = vsyncpa [#allocation3], 0
    %10 = vsyncpa [#allocation4], 0
    // Predicated region
    $region2: #{tpu_custom_call.1} parent=1 // pred_check
      _
    $region3: #{tpu_custom_call.1} parent=1 // pred_check_branch
      %12 = sbr.rel (0) target = $region5
    $region4: #{tpu_custom_call.1} parent=1 // pred_region
      _
    $region5: #{tpu_custom_call.1} parent=1 // pred_fallthru
      _
    // Predicated region
    $region6: #{tpu_custom_call.1} parent=1 // pred_check
      _
    $region7: #{tpu_custom_call.1} parent=1 // pred_check_branch
      %14 = sbr.rel (0) target = $region9
    $region8: #{tpu_custom_call.1} parent=1 // pred_region
      _
    $region9: #{tpu_custom_call.1} parent=1 // pred_fallthru
      _
    // Predicated region
    $region10: #{tpu_custom_call.1} parent=1 // pred_check
      _
    $region11: #{tpu_custom_call.1} parent=1 // pred_check_branch
      %16 = sbr.rel (0) target = $region13
    $region12: #{tpu_custom_call.1} parent=1 // pred_region
      %s18 = ssub.s32 256, 256
      %19 = vsyncadd [#allocation3], %s18
      %s21 = sshll.u32 [#allocation2], 4
      %s22 = int_to_ptr.vmem [resolvable:$true] %s21
      %24 = dma.hbm_to_vmem [thread:$0]  %s2, 256, %s22, [#allocation3]
    $region13: #{tpu_custom_call.1} parent=1 // pred_fallthru
      _
    // Predicated region
    $region14: #{tpu_custom_call.1} parent=1 // pred_check
      _
    $region15: #{tpu_custom_call.1} parent=1 // pred_check_branch
      %26 = sbr.rel (0) target = $region17
    $region16: #{tpu_custom_call.1} parent=1 // pred_region
      _
    $region17: #{tpu_custom_call.1} parent=1 // pred_fallthru
      _
    // Predicated region
    $region18: #{tpu_custom_call.1} parent=1 // pred_check
      _
    $region19: #{tpu_custom_call.1} parent=1 // pred_check_branch
      %28 = sbr.rel (0) target = $region21
    $region20: #{tpu_custom_call.1} parent=1 // pred_region
      %29 = dma.done [#allocation3], 256
    $region21: #{tpu_custom_call.1} parent=1 // pred_fallthru
      _
    %v30 = vld [vmem:[%s0] sm:$0xff]
    %v31 = vld [vmem:[%s0 + $0x8] sm:$0xff]
    %v32 = vld [vmem:[#allocation2] sm:$0x7f]
    %v33 = vld [vmem:[#allocation2 + $0x8] sm:$0x7f]
    %v34 = vld [vmem:[%s3] sm:$0x3]
    %v36 = vlaneseq
    %v37 = vshrl.u32 %v36, 7
    %v38 = vsub.s32 0, %v37
    %v39 = vrot.slane %v34, %v38
    %v40 = vlaneseq
    %v41 = vshrl.u32 %v40, 7
    %v42 = vsub.s32 1, %v41
    %v43 = vrot.slane %v34, %v42
    %vm46 = vcmask 56320
    %v48 = vsel %vm46, %v30, 0
    %v51 = vsel %vm46, %v31, 0
    %vm53 = vcmask 1046528
    %v55 = vsel %vm53, %v32, 0
    %v58 = vsel %vm53, %v33, 0
    %60 = vmatprep.subr.mxu0 %v58
    %61 = vmatpush1.msra.mxu0 %v55
    %62 = vmatprep.subr.mxu0 0.0
    %63 = vmatpush1.msra.mxu0 0.0
    %64 = vmatprep.subr.mxu0 0.0
    %65 = vmatpush1.msra.mxu0 0.0
    %66 = vmatprep.subr.mxu0 0.0
    %67 = vmatpush1.msra.mxu0 0.0
    %68 = vmatprep.subr.mxu0 0.0
    %69 = vmatpush1.msra.mxu0 0.0
    %70 = vmatprep.subr.mxu0 0.0
    %71 = vmatpush1.msra.mxu0 0.0
    %72 = vmatprep.subr.mxu0 0.0
    %73 = vmatpush1.msra.mxu0 0.0
    %74 = vmatprep.subr.mxu0 0.0
    %75 = vmatpush1.msra.mxu0 0.0
    %76 = vmatprep.subr.mxu0 0.0
    %77 = vmatpush1.msra.mxu0 0.0
    %78 = vmatprep.subr.mxu0 0.0
    %79 = vmatpush1.msra.mxu0 0.0
    %80 = vmatprep.subr.mxu0 0.0
    %81 = vmatpush1.msra.mxu0 0.0
    %82 = vmatprep.subr.mxu0 0.0
    %83 = vmatpush1.msra.mxu0 0.0
    %84 = vmatprep.subr.mxu0 0.0
    %85 = vmatpush1.msra.mxu0 0.0
    %86 = vmatprep.subr.mxu0 0.0
    %87 = vmatpush1.msra.mxu0 0.0
    %88 = vmatprep.subr.mxu0 0.0
    %89 = vmatpush1.msra.mxu0 0.0
    %90 = vmatprep.subr.mxu0 0.0
    %91 = vmatpush1.msra.mxu0 0.0
    %92 = vmatprep.subr.mxu0 0.0
    %93 = vmatpush1.msra.mxu0 0.0
    %94 = vmatprep.subr.mxu0 0.0
    %95 = vmatpush1.msra.mxu0 0.0
    %96 = vmatprep.subr.mxu0 0.0
    %97 = vmatpush1.msra.mxu0 0.0
    %98 = vmatprep.subr.mxu0 0.0
    %99 = vmatpush1.msra.mxu0 0.0
    %100 = vmatprep.subr.mxu0 0.0
    %101 = vmatpush1.msra.mxu0 0.0
    %102 = vmatprep.subr.mxu0 0.0
    %103 = vmatpush1.msra.mxu0 0.0
    %104 = vmatprep.subr.mxu0 0.0
    %105 = vmatpush1.msra.mxu0 0.0
    %106 = vmatprep.subr.mxu0 0.0
    %107 = vmatpush1.msra.mxu0 0.0
    %108 = vmatprep.subr.mxu0 0.0
    %109 = vmatpush1.msra.mxu0 0.0
    %110 = vmatprep.subr.mxu0 0.0
    %111 = vmatpush1.msra.mxu0 0.0
    %112 = vmatprep.subr.mxu0 0.0
    %113 = vmatpush1.msra.mxu0 0.0
    %114 = vmatprep.subr.mxu0 0.0
    %115 = vmatpush1.msra.mxu0 0.0
    %116 = vmatprep.subr.mxu0 0.0
    %117 = vmatpush1.msra.mxu0 0.0
    %118 = vmatprep.subr.mxu0 0.0
    %119 = vmatpush1.msra.mxu0 0.0
    %120 = vmatprep.subr.mxu0 0.0
    %121 = vmatpush1.msra.mxu0 0.0
    %122 = vmatprep.subr.mxu0 0.0
    %123 = vmatpush1.msra.mxu0 0.0
    %124 = vmatprep.mubr.f32.mxu0 0.0
    %125 = vmatmul.mubr.f32.gmra.mrb[0].mxu0 %v48
    %v126 = vpop.f32.mrb[0].mxu0
    %v127 = vadd.f32 %v39, %v126
    %v128 = vpop.f32.mrb[0].mxu0
    %v129 = vadd.f32 %v43, %v128
    %130 = vmatprep.mubr.f32.mxu0 0.0
    %131 = vmatmul.mubr.f32.gmra.mrb[0].mxu0 %v51
    %v132 = vpop.f32.mrb[0].mxu0
    %v133 = vadd.f32 %v39, %v132
    %v134 = vpop.f32.mrb[0].mxu0
    %v135 = vadd.f32 %v43, %v134
    %136 = vdwg.mxu0
    %v137 = vld [vmem:[%s1] sm:$0xff]
    %v138 = vld [vmem:[%s1 + $0x8] sm:$0xff]
    %141 = vrot.lane.b32.xlu0 %v137, 20
    %v142 = vpop.permute.xlu0 %141
    %143 = vrot.lane.b32.xlu0 %v138, 20
    %v144 = vpop.permute.xlu0 %143
    %147 = vrot.lane.b32.xlu0 %v137, 40
    %v148 = vpop.permute.xlu0 %147
    %149 = vrot.lane.b32.xlu0 %v138, 40
    %v150 = vpop.permute.xlu0 %149
    %153 = vrot.lane.b32.xlu0 %v137, 60
    %v154 = vpop.permute.xlu0 %153
    %155 = vrot.lane.b32.xlu0 %v138, 60
    %v156 = vpop.permute.xlu0 %155
    %159 = vrot.lane.b32.xlu0 %v137, 80
    %v160 = vpop.permute.xlu0 %159
    %161 = vrot.lane.b32.xlu0 %v138, 80
    %v162 = vpop.permute.xlu0 %161
    %165 = vrot.lane.b32.xlu0 %v137, 100
    %v166 = vpop.permute.xlu0 %165
    %167 = vrot.lane.b32.xlu0 %v138, 100
    %v168 = vpop.permute.xlu0 %167
    %171 = vrot.lane.b32.xlu0 %v137, 120
    %v172 = vpop.permute.xlu0 %171
    %173 = vrot.lane.b32.xlu0 %v138, 120
    %v174 = vpop.permute.xlu0 %173
    %177 = vrot.lane.b32.xlu0 %v137, 12
    %v178 = vpop.permute.xlu0 %177
    %179 = vrot.lane.b32.xlu0 %v138, 12
    %v180 = vpop.permute.xlu0 %179
    %vm183 = vcmask 162816
    %v184 = vsel %vm183, %v137, %v142
    %v185 = vsel %vm183, %v138, %v144
    %vm186 = vcmask 326656
    %v187 = vsel %vm186, %v184, %v148
    %v188 = vsel %vm186, %v185, %v150
    %vm189 = vcmask 490496
    %v190 = vsel %vm189, %v187, %v154
    %v191 = vsel %vm189, %v188, %v156
    %vm192 = vcmask 654336
    %v193 = vsel %vm192, %v190, %v160
    %v194 = vsel %vm192, %v191, %v162
    %vm195 = vcmask 818176
    %v196 = vsel %vm195, %v193, %v166
    %v197 = vsel %vm195, %v194, %v168
    %vm198 = vcmask 982016
    %v199 = vsel %vm198, %v196, %v172
    %v200 = vsel %vm198, %v197, %v174
    %vm201 = vcmask 97280
    %v202 = vsel %vm201, %v172, %v178
    %v203 = vsel %vm201, %v174, %v180
    %v204 = vmul.f32 %v127, %v199
    %v205 = vmul.f32 %v129, %v202
    %v206 = vmul.f32 %v133, %v200
    %v207 = vmul.f32 %v135, %v203
    %208 = vst [vmem:[#allocation5] sm:$0xff] %v204
    %vm209 = vcmask 261120
    %210 = vst.msk [vmem:[#allocation5 + $0x8] sm:$0xff] %vm209, %v205
    %211 = vst [vmem:[#allocation5 + $0x10] sm:$0xff] %v206
    %212 = vst.msk [vmem:[#allocation5 + $0x18] sm:$0xff] %vm209, %v207
    // Predicated region
    $region22: #{tpu_custom_call.1} parent=1 // pred_check
      _
    $region23: #{tpu_custom_call.1} parent=1 // pred_check_branch
      %214 = sbr.rel (0) target = $region25
    $region24: #{tpu_custom_call.1} parent=1 // pred_region
      %s216 = ssub.s32 512, 512
      %217 = vsyncadd [#allocation4], %s216
      %s218 = sshll.u32 [#allocation5], 4
      %s219 = int_to_ptr.vmem [resolvable:$true] %s218
      %224 = dma.vmem_to_hbm [thread:$0]  %s219, 512, %s4, [#allocation4], 256, 256, 16
    $region25: #{tpu_custom_call.1} parent=1 // pred_fallthru
      _
    // Predicated region
    $region26: #{tpu_custom_call.1} parent=1 // pred_check
      _
    $region27: #{tpu_custom_call.1} parent=1 // pred_check_branch
      %226 = sbr.rel (0) target = $region29
    $region28: #{tpu_custom_call.1} parent=1 // pred_region
      %227 = dma.done [#allocation4], 512
    $region29: #{tpu_custom_call.1} parent=1 // pred_fallthru
      _
    %228 = vsyncpa [#allocation3], 1
    %229 = vsyncpa [#allocation4], 1

</llo_original>
